<compile_context>
chip_gen: v7x
topology: tpu7x:2x2x1
jax: 0.10.0
libtpu: 0.0.40
codegen_flags: <defaults>
</compile_context>

<pallas_src>
import functools

import numpy as np
import jax
import jax.numpy as jnp
from jax import lax
from jax.experimental import pallas as pl
from jax.experimental.pallas import tpu as pltpu

SEG_LOSS_WEIGHT = 0.0001
SIG_LOSS_WEIGHT = 0.0001

LANES = 1024                  # lane width of every tile (8 full 128-lane vregs)
LANE_GROUPS = LANES // 128
MAX_TILE_R = 512              # rows per grid tile -> 2 MiB f32 per input block
CHUNK_R = 16                  # in-kernel accumulation chunk (16 rows x 1024 lanes)
_MIN_PALLAS_ELEMS = LANES     # below one full 1024-lane row, just use jnp


def _negated_bce(p, g):
    """g*log(p) + (1-g)*log(1-p) with torch's -100 log clamp (== -BCE)."""
    p = p.astype(jnp.float32)
    g = g.astype(jnp.float32)
    log_p = jnp.maximum(jnp.log(p), -100.0)
    log_q = jnp.maximum(jnp.log(1.0 - p), -100.0)
    # Factor the common log_q term: saves the (1-g) sub/mul and the negate.
    return log_q + g * (log_p - log_q)


def _lane_reduce(x):
    """(R, LANES) -> (R, 128) using pure VALU vreg adds (no XLU)."""
    acc = x[:, 0:128]
    for k in range(1, LANE_GROUPS):
        acc = acc + x[:, k * 128:(k + 1) * 128]
    return acc


def _bce_partial_kernel(pred_ref, gt_ref, out_ref, *, rows_total, tile_r):
    """Per-tile partial sums of the NEGATED BCE.

    pred_ref, gt_ref : (tile_r, LANES) blocks in VMEM
    out_ref          : (8, 128) f32 per-tile partial-sum block
    """
    if tile_r == rows_total:
        # Single tile exactly covering the whole array: no masking needed.
        contrib = _negated_bce(pred_ref[...], gt_ref[...])      # (rows, LANES)
        r = _lane_reduce(contrib)                                # (rows, 128)
        s = jnp.sum(r, axis=0, keepdims=True)                    # (1, 128), one XLU reduce
        row0 = lax.broadcasted_iota(jnp.int32, (8, 128), 0) == 0
        out_ref[...] = jnp.where(row0, jnp.broadcast_to(s, (8, 128)), 0.0)
    else:
        # Multi-tile path (tile_r == MAX_TILE_R): accumulate 16-row chunks.
        base_row = pl.program_id(0) * tile_r
        needs_mask = (rows_total % tile_r) != 0                  # static
        n_chunks = tile_r // CHUNK_R
        if needs_mask:
            sub_iota = lax.broadcasted_iota(jnp.int32, (CHUNK_R, 1), 0)

        def body(c, acc):
            r0 = pl.multiple_of(c * CHUNK_R, CHUNK_R)
            p = pred_ref[pl.ds(r0, CHUNK_R), :]
            g = gt_ref[pl.ds(r0, CHUNK_R), :]
            contrib = _negated_bce(p, g)                         # (CHUNK_R, LANES)
            if needs_mask:
                # Only the (padded) last grid tile contains invalid rows;
                # garbage (possibly NaN) rows are selected away here.
                valid = (base_row + r0 + sub_iota) < rows_total  # (CHUNK_R, 1)
                contrib = jnp.where(valid, contrib, 0.0)
            r = _lane_reduce(contrib)                            # (CHUNK_R, 128)
            return acc + r[0:8, :] + r[8:16, :]

        acc0 = jnp.zeros((8, 128), jnp.float32)
        out_ref[...] = lax.fori_loop(0, n_chunks, body, acc0, unroll=4)


def _bce_bulk_sum_pallas(pred2, gt2):
    """Negated BCE sum over a (rows, LANES)-shaped pair via the tiled kernel."""
    rows = pred2.shape[0]
    tile_r = rows if rows <= MAX_TILE_R else MAX_TILE_R
    grid = pl.cdiv(rows, tile_r)
    n_elems = rows * LANES
    in_bytes = n_elems * (pred2.dtype.itemsize + gt2.dtype.itemsize)
    out_bytes = grid * 8 * 128 * 4

    kernel = functools.partial(_bce_partial_kernel, rows_total=rows, tile_r=tile_r)
    partials = pl.pallas_call(
        kernel,
        out_shape=jax.ShapeDtypeStruct((grid * 8, 128), jnp.float32),
        grid=(grid,),
        in_specs=[
            pl.BlockSpec((tile_r, LANES), lambda i: (i, 0)),
            pl.BlockSpec((tile_r, LANES), lambda i: (i, 0)),
        ],
        out_specs=pl.BlockSpec((8, 128), lambda i: (i, 0)),
        compiler_params=pltpu.CompilerParams(
            dimension_semantics=("parallel",),
        ),
        cost_estimate=pl.CostEstimate(
            flops=7 * n_elems,
            transcendentals=2 * n_elems,
            bytes_accessed=in_bytes + out_bytes,
        ),
    )(pred2, gt2)
    # Tiny final reduction over per-tile partials in XLA.
    return jnp.sum(partials)


def _bce_sum_jnp(p, g):
    """Plain-jnp BCE sum for tiny inputs / ragged tails (no Pallas launch)."""
    p = p.astype(jnp.float32)
    g = g.astype(jnp.float32)
    lp = jnp.maximum(jnp.log(p), -100.0)
    lq = jnp.maximum(jnp.log(1.0 - p), -100.0)
    return -jnp.sum(g * lp + (1.0 - g) * lq)


def _bce_total_sum(pred, gt):
    """Total elementwise BCE sum (torch.nn.BCELoss semantics) over any shape."""
    flat_p = pred.reshape(-1)
    flat_g = gt.reshape(-1)
    n = flat_p.shape[0]

    total = jnp.float32(0.0)
    n_main = (n // LANES) * LANES
    if n_main >= _MIN_PALLAS_ELEMS:
        rows = n_main // LANES
        # Free bitcast when n % LANES == 0 (the common case for seg maps);
        # otherwise only the >=1024-element prefix is sliced for the kernel.
        p2 = flat_p[:n_main].reshape(rows, LANES)
        g2 = flat_g[:n_main].reshape(rows, LANES)
        total = total - _bce_bulk_sum_pallas(p2, g2)   # kernel returns -BCE sum
        tail_start = n_main
    else:
        tail_start = 0

    if tail_start < n:
        total = total + _bce_sum_jnp(flat_p[tail_start:], flat_g[tail_start:])
    return total


def seg_sig_loss_forward(pred_seg, pred_sig, gt_seg, gt_sig):
    """JAX/Pallas equivalent of Seg_Sig_Loss.forward."""
    seg_loss = _bce_total_sum(pred_seg, gt_seg)
    sig_loss = _bce_total_sum(pred_sig, gt_sig)
    return {
        'Seg_Loss': seg_loss * SEG_LOSS_WEIGHT,
        'Sig_Loss': sig_loss * SIG_LOSS_WEIGHT,
    }


def _reference_numpy(pred_seg, pred_sig, gt_seg, gt_sig):
    def bce_sum(p, g):
        p = np.asarray(p, dtype=np.float64)
        g = np.asarray(g, dtype=np.float64)
        lp = np.maximum(np.log(p), -100.0)
        lq = np.maximum(np.log(1.0 - p), -100.0)
        return float(np.sum(-(g * lp + (1.0 - g) * lq)))
    return {
        'Seg_Loss': bce_sum(pred_seg, gt_seg) * SEG_LOSS_WEIGHT,
        'Sig_Loss': bce_sum(pred_sig, gt_sig) * SIG_LOSS_WEIGHT,
    }


if __name__ == "__main__":
    key = jax.random.PRNGKey(0)
    k1, k2, k3, k4 = jax.random.split(key, 4)

    # Small shapes consistent with the module: segmentation map + signal vector.
    seg_shape = (2, 4, 16, 16)   # batch=2, channels=4, 16x16 spatial
    sig_shape = (2, 8)           # batch=2, seq=8

    pred_seg = jax.nn.sigmoid(jax.random.normal(k1, seg_shape, dtype=jnp.float32))
    pred_sig = jax.nn.sigmoid(jax.random.normal(k2, sig_shape, dtype=jnp.float32))
    gt_seg = (jax.random.uniform(k3, seg_shape) > 0.5).astype(jnp.float32)
    gt_sig = (jax.random.uniform(k4, sig_shape) > 0.5).astype(jnp.float32)

    fwd = jax.jit(seg_sig_loss_forward)
    out = jax.block_until_ready(fwd(pred_seg, pred_sig, gt_seg, gt_sig))

    ref = _reference_numpy(pred_seg, pred_sig, gt_seg, gt_sig)
    assert np.allclose(float(out['Seg_Loss']), ref['Seg_Loss'], rtol=1e-4, atol=1e-6), (
        float(out['Seg_Loss']), ref['Seg_Loss'])
    assert np.allclose(float(out['Sig_Loss']), ref['Sig_Loss'], rtol=1e-4, atol=1e-6), (
        float(out['Sig_Loss']), ref['Sig_Loss'])

    # Secondary check exercising the multi-tile chunked path (grid > 1 with a
    # masked ragged last tile): 2*4*320*256 = 655360 elements -> 640 rows.
    seg_shape2 = (2, 4, 320, 256)
    k5, k6 = jax.random.split(k1)
    pred_seg2 = jax.nn.sigmoid(jax.random.normal(k5, seg_shape2, dtype=jnp.float32))
    gt_seg2 = (jax.random.uniform(k6, seg_shape2) > 0.5).astype(jnp.float32)
    out2 = jax.block_until_ready(
        jax.jit(seg_sig_loss_forward)(pred_seg2, pred_sig, gt_seg2, gt_sig))
    ref2 = _reference_numpy(pred_seg2, pred_sig, gt_seg2, gt_sig)
    assert np.allclose(float(out2['Seg_Loss']), ref2['Seg_Loss'], rtol=2e-4, atol=1e-5), (
        float(out2['Seg_Loss']), ref2['Seg_Loss'])

    print("KERNEL_OK")
</pallas_src>

<mosaic_0001>
module attributes {stable_mosaic.version = 11 : i64} {
  func.func @_bce_partial_kernel(%arg0: i32, %arg1: memref<2x1024xf32, #tpu.memory_space<vmem>>, %arg2: memref<2x1024xf32, #tpu.memory_space<vmem>>, %arg3: memref<8x128xf32, #tpu.memory_space<vmem>>) attributes {dimension_semantics = [#tpu.dimension_semantics<parallel>], iteration_bounds = array<i64: 1>, scalar_prefetch = 0 : i64, scratch_operands = 0 : i64, tpu.core_type = #tpu.core_type<tc>, window_params = [{transform_indices = @transform_0, window_bounds = array<i64: 2, 1024>}, {transform_indices = @transform_1, window_bounds = array<i64: 2, 1024>}, {transform_indices = @transform_2, window_bounds = array<i64: 8, 128>}]} {
    %c0 = arith.constant 0 : index
    %c0_0 = arith.constant 0 : index
    %0 = vector.load %arg1[%c0, %c0_0] : memref<2x1024xf32, #tpu.memory_space<vmem>>, vector<2x1024xf32>
    %c0_1 = arith.constant 0 : index
    %c0_2 = arith.constant 0 : index
    %1 = vector.load %arg2[%c0_1, %c0_2] : memref<2x1024xf32, #tpu.memory_space<vmem>>, vector<2x1024xf32>
    %2 = math.log %0 : vector<2x1024xf32>
    %cst = arith.constant -1.000000e+02 : f32
    %3 = vector.broadcast %cst : f32 to vector<2x1024xf32>
    %4 = arith.maximumf %2, %3 : vector<2x1024xf32>
    %cst_3 = arith.constant 1.000000e+00 : f32
    %5 = vector.broadcast %cst_3 : f32 to vector<2x1024xf32>
    %6 = arith.subf %5, %0 : vector<2x1024xf32>
    %7 = math.log %6 : vector<2x1024xf32>
    %cst_4 = arith.constant -1.000000e+02 : f32
    %8 = vector.broadcast %cst_4 : f32 to vector<2x1024xf32>
    %9 = arith.maximumf %7, %8 : vector<2x1024xf32>
    %10 = arith.subf %4, %9 : vector<2x1024xf32>
    %11 = arith.mulf %1, %10 : vector<2x1024xf32>
    %12 = arith.addf %9, %11 : vector<2x1024xf32>
    %13 = vector.extract_strided_slice %12 {offsets = [0, 0], sizes = [2, 128], strides = [1, 1]} : vector<2x1024xf32> to vector<2x128xf32>
    %14 = vector.extract_strided_slice %12 {offsets = [0, 128], sizes = [2, 128], strides = [1, 1]} : vector<2x1024xf32> to vector<2x128xf32>
    %15 = arith.addf %13, %14 : vector<2x128xf32>
    %16 = vector.extract_strided_slice %12 {offsets = [0, 256], sizes = [2, 128], strides = [1, 1]} : vector<2x1024xf32> to vector<2x128xf32>
    %17 = arith.addf %15, %16 : vector<2x128xf32>
    %18 = vector.extract_strided_slice %12 {offsets = [0, 384], sizes = [2, 128], strides = [1, 1]} : vector<2x1024xf32> to vector<2x128xf32>
    %19 = arith.addf %17, %18 : vector<2x128xf32>
    %20 = vector.extract_strided_slice %12 {offsets = [0, 512], sizes = [2, 128], strides = [1, 1]} : vector<2x1024xf32> to vector<2x128xf32>
    %21 = arith.addf %19, %20 : vector<2x128xf32>
    %22 = vector.extract_strided_slice %12 {offsets = [0, 640], sizes = [2, 128], strides = [1, 1]} : vector<2x1024xf32> to vector<2x128xf32>
    %23 = arith.addf %21, %22 : vector<2x128xf32>
    %24 = vector.extract_strided_slice %12 {offsets = [0, 768], sizes = [2, 128], strides = [1, 1]} : vector<2x1024xf32> to vector<2x128xf32>
    %25 = arith.addf %23, %24 : vector<2x128xf32>
    %26 = vector.extract_strided_slice %12 {offsets = [0, 896], sizes = [2, 128], strides = [1, 1]} : vector<2x1024xf32> to vector<2x128xf32>
    %27 = arith.addf %25, %26 : vector<2x128xf32>
    %cst_5 = arith.constant dense<0.000000e+00> : vector<128xf32>
    %28 = vector.multi_reduction <add>, %27, %cst_5 [0] : vector<2x128xf32> to vector<128xf32>
    %29 = vector.shape_cast %28 : vector<128xf32> to vector<1x128xf32>
    %30 = tpu.iota {dimensions = array<i32: 0>} : vector<8x128xi32>
    %c0_i32 = arith.constant 0 : i32
    %31 = vector.broadcast %c0_i32 : i32 to vector<8x128xi32>
    %32 = arith.cmpi eq, %30, %31 : vector<8x128xi32>
    %33 = vector.shape_cast %29 : vector<1x128xf32> to vector<1x128xf32>
    %34 = vector.broadcast %33 : vector<1x128xf32> to vector<8x128xf32>
    %cst_6 = arith.constant 0.000000e+00 : f32
    %35 = vector.broadcast %cst_6 : f32 to vector<8x128xf32>
    %36 = arith.select %32, %34, %35 : vector<8x128xi1>, vector<8x128xf32>
    %c0_7 = arith.constant 0 : index
    %c0_8 = arith.constant 0 : index
    %37 = vector.load %arg3[%c0_7, %c0_8] : memref<8x128xf32, #tpu.memory_space<vmem>>, vector<8x128xf32>
    tpu.vector_store %arg3[%c0_7, %c0_8], %36 {strides = array<i32>} : memref<8x128xf32, #tpu.memory_space<vmem>>, vector<8x128xf32>,
    return
  }
  func.func @transform_0(%arg0: i32) -> (i32, i32) {
    %c0_i32 = arith.constant 0 : i32
    %c0_i32_0 = arith.constant 0 : i32
    return %arg0, %c0_i32 : i32, i32
  }
  func.func @transform_1(%arg0: i32) -> (i32, i32) {
    %c0_i32 = arith.constant 0 : i32
    %c0_i32_0 = arith.constant 0 : i32
    return %arg0, %c0_i32 : i32, i32
  }
  func.func @transform_2(%arg0: i32) -> (i32, i32) {
    %c0_i32 = arith.constant 0 : i32
    %c0_i32_0 = arith.constant 0 : i32
    return %arg0, %c0_i32 : i32, i32
  }
}

</mosaic_0001>

<llo_original>
// kernel: seg_sig_loss_forward.1
$region0: #{seg_sig_loss_forward.1}
  #allocation0 [shape = 'u32[]', space=smem, size = 0x4, offset = 0x4, fixed_abs, tag = 'smem constant byte address 0x4 - core index']
  #allocation1 [shape = 'u32[144,128]{1,0:T(1,128)}', space=vmem, size = 0x12000, scoped, tag = 'internal scratch']
  %s0 = inlined_call_operand.vmem [shape: f32[2,1024], index: 0, kind: input, shape index: {}]
  %s1 = inlined_call_operand.vmem [shape: f32[2,1024], index: 1, kind: input, shape index: {}]
  %s2 = inlined_call_operand.vmem [shape: f32[8,128], index: 2, kind: output, shape index: {}]
  %s3 = sld [smem:[#allocation0]]
  $region18: #{seg_sig_loss_forward.1} parent=0
    _
  %s5 = ssub.s32 1, %s3
  %s6 = scalar_select 0, %s5, %s3
  // Predicated region
  $region2: #{seg_sig_loss_forward.1} parent=0 // pred_check
    _
  $region3: #{seg_sig_loss_forward.1} parent=0 // pred_check_branch
    %8 = sbr.rel (0) target = $region5
  $region4: #{seg_sig_loss_forward.1} parent=0 // pred_region
    _
  $region5: #{seg_sig_loss_forward.1} parent=0 // pred_fallthru
    _
  // Predicated region
  $region6: #{seg_sig_loss_forward.1} parent=0 // pred_check
    _
  $region7: #{seg_sig_loss_forward.1} parent=0 // pred_check_branch
    %10 = sbr.rel (0) target = $region9
  $region8: #{seg_sig_loss_forward.1} parent=0 // pred_region
    _
  $region9: #{seg_sig_loss_forward.1} parent=0 // pred_fallthru
    _
  %v11 = vld [vmem:[%s0] sm:$0xff]
  %v12 = vld [vmem:[%s0 + $0x8] sm:$0xff]
  %v13 = vld [vmem:[%s1] sm:$0xff]
  %v14 = vld [vmem:[%s1 + $0x8] sm:$0xff]
  %v15 = vlog2.pop %v11
  %v16 = vmul.f32 %v15, 0.6931472
  %v17 = vlog2.pop %v12
  %v18 = vmul.f32 %v17, 0.6931472
  %v19 = vmax.f32 %v16, -100.0
  %v20 = vmax.f32 %v18, -100.0
  %v21 = vsub.f32 1.0, %v11
  %v22 = vsub.f32 1.0, %v12
  %v23 = vlog2.pop %v21
  %v24 = vmul.f32 %v23, 0.6931472
  %v25 = vlog2.pop %v22
  %v26 = vmul.f32 %v25, 0.6931472
  %v27 = vmax.f32 %v24, -100.0
  %v28 = vmax.f32 %v26, -100.0
  %v29 = vsub.f32 %v19, %v27
  %v30 = vsub.f32 %v20, %v28
  %v31 = vmul.f32 %v13, %v29
  %v32 = vmul.f32 %v14, %v30
  %v33 = vadd.f32 %v27, %v31
  %v34 = vadd.f32 %v28, %v32
  %v36 = vrot.slane %v33, 2
  %v38 = vadd.f32 %v33, %v36
  %v39 = vrot.slane %v33, 4
  %v41 = vadd.f32 %v38, %v39
  %v42 = vrot.slane %v33, 6
  %v44 = vadd.f32 %v41, %v42
  %v45 = vadd.f32 %v44, %v34
  %v47 = vrot.slane %v34, 2
  %v49 = vadd.f32 %v45, %v47
  %v50 = vrot.slane %v34, 4
  %v52 = vadd.f32 %v49, %v50
  %v53 = vrot.slane %v34, 6
  %v55 = vadd.f32 %v52, %v53
  %vm56 = vcmask 1041408
  %v57 = vsel %vm56, %v55, 0.0
  %v58 = vrot.slane %v57, 4
  %v59 = vadd.f32 %v57, %v58
  %v60 = vrot.slane %v59, 2
  %v61 = vadd.f32 %v59, %v60
  %v62 = vrot.slane %v61, 1
  %v63 = vadd.f32 %v61, %v62
  %v64 = vlaneseq
  %v65 = vshrl.u32 %v64, 7
  %vm66 = vcmp.eq.s32.totalorder %v65, 0
  %v67 = vsel %vm66, %v63, 0.0
  %68 = vst [vmem:[%s2] sm:$0xff] %v67
  // Predicated region
  $region10: #{seg_sig_loss_forward.1} parent=0 // pred_check
    _
  $region11: #{seg_sig_loss_forward.1} parent=0 // pred_check_branch
    %70 = sbr.rel (0) target = $region13
  $region12: #{seg_sig_loss_forward.1} parent=0 // pred_region
    _
  $region13: #{seg_sig_loss_forward.1} parent=0 // pred_fallthru
    _
  // Predicated region
  $region14: #{seg_sig_loss_forward.1} parent=0 // pred_check
    _
  $region15: #{seg_sig_loss_forward.1} parent=0 // pred_check_branch
    %72 = sbr.rel (0) target = $region17
  $region16: #{seg_sig_loss_forward.1} parent=0 // pred_region
    _
  $region17: #{seg_sig_loss_forward.1} parent=0 // pred_fallthru
    _

</llo_original>
